<compile_context>
chip_gen: v6e
topology: v6e:2x2x1
jax: 0.10.0
libtpu: 0.0.40
codegen_flags: <defaults>
</compile_context>

<pallas_src>
import functools

import jax
import jax.numpy as jnp
from jax.experimental import pallas as pl
from jax.experimental.pallas import tpu as pltpu

LANES = 128
SUBLANES = 8


def _round_up(x, m):
    return ((x + m - 1) // m) * m


def _default_num_splits():
    # 2 only for multi-TensorCore (megacore) chips (v4/v5p/v7x). v5e/v6e are
    # single-TC, where a second split is pure overhead.
    try:
        kind = jax.devices()[0].device_kind.lower()
    except Exception:
        return 1
    single_tc = ("lite" in kind) or ("v5e" in kind) or ("v6e" in kind)
    return 1 if single_tc else 2


def _focal_kernel(x_ref, t_ref, o_ref, acc_ref, *,
                  scale, gamma, logits, full_rows, rem,
                  block_rows, steps, last_block, needs_mask):
    i = pl.program_id(1)

    @pl.when(i == 0)
    def _():
        acc_ref[...] = jnp.zeros_like(acc_ref)

    x = x_ref[...].astype(jnp.float32)
    t = t_ref[...].astype(jnp.float32)

    if logits:
        # Numerically-stable BCE-with-logits
        # (matches F.binary_cross_entropy_with_logits).
        bce = jnp.maximum(x, 0.0) - x * t + jnp.log1p(jnp.exp(-jnp.abs(x)))
    else:
        # F.binary_cross_entropy clamps each log term at -100.
        log_x = jnp.maximum(jnp.log(x), -100.0)
        log_1mx = jnp.maximum(jnp.log1p(-x), -100.0)
        bce = -(t * log_x + (1.0 - t) * log_1mx)

    pt = jnp.exp(-bce)
    if isinstance(gamma, int):
        focal_w = (1.0 - pt) ** gamma            # lax.integer_pow — VPU only
    else:
        focal_w = jnp.power(jnp.maximum(1.0 - pt, 0.0), gamma)
    f_loss = focal_w * bce                       # alpha & 1/N folded into epilogue

    def _accumulate(v):
        # (block_rows, 128) -> (block_rows//8, 8, 128): tile-aligned reshape,
        # then pure elementwise vreg adds into the single (8, 128) accumulator.
        acc_ref[...] += v.reshape(-1, SUBLANES, LANES).sum(axis=0)

    if needs_mask:
        blk = pl.program_id(0) * steps + i

        @pl.when(blk < last_block)
        def _():
            _accumulate(f_loss)

        @pl.when(blk >= last_block)
        def _():
            # Row-relative mask: no 32-bit element-index overflow for any
            # realistic input size (row indices stay small).
            grow = blk * block_rows + jax.lax.broadcasted_iota(
                jnp.int32, f_loss.shape, 0)
            mask = grow < full_rows
            if rem:
                col = jax.lax.broadcasted_iota(jnp.int32, f_loss.shape, 1)
                mask = mask | ((grow == full_rows) & (col < rem))
            # Keep as a select so garbage/NaN in the ragged tail can't propagate.
            _accumulate(jnp.where(mask, f_loss, 0.0))
    else:
        _accumulate(f_loss)

    @pl.when(i == steps - 1)
    def _():
        o_ref[...] = (acc_ref[...] * scale)[None]


def focal_loss_bce(inputs, targets, *, alpha=0.25, gamma=2, logits=True,
                   max_block_rows=8192, num_splits=None):
    """Mean focal BCE loss (reduce=True path of FocalLossBCE)."""
    # TODO(synk): reduce=False (per-element loss tensor) path not implemented.
    assert inputs.shape == targets.shape
    n_elem = int(inputs.size)
    assert n_elem > 0

    # Integral float gamma -> int so the kernel takes the integer_pow path.
    if isinstance(gamma, float) and float(gamma).is_integer():
        gamma = int(gamma)
    if num_splits is None:
        num_splits = _default_num_splits()

    x_flat = inputs.reshape(-1)
    t_flat = targets.reshape(-1)

    # Pad only to an (8, 128) tile multiple (<= 1023 elems; zero copy when the
    # size is already aligned).  Everything else (ragged last block, duplicate
    # megacore block) is handled in-kernel by the gated mask.
    tile = SUBLANES * LANES
    padded = _round_up(n_elem, tile)
    pad = padded - n_elem
    if pad:
        x_flat = jnp.pad(x_flat, (0, pad))
        t_flat = jnp.pad(t_flat, (0, pad))
    rows = padded // LANES                       # always a multiple of 8
    x2 = x_flat.reshape(rows, LANES)
    t2 = t_flat.reshape(rows, LANES)

    block_rows = min(_round_up(max_block_rows, SUBLANES), rows)
    blocks_needed = pl.cdiv(rows, block_rows)
    steps = pl.cdiv(blocks_needed, num_splits)
    grid = (num_splits, steps)
    last_block = blocks_needed - 1
    covered = num_splits * steps * block_rows * LANES
    needs_mask = covered != n_elem

    # Clamp the block index only when the grid has a (single) duplicate block
    # beyond the data; that block is fully masked out in-kernel.
    if num_splits * steps > blocks_needed:
        in_idx = lambda p, i: (jnp.minimum(p * steps + i, last_block), 0)
    else:
        in_idx = lambda p, i: (p * steps + i, 0)
    in_blk = pl.BlockSpec((block_rows, LANES), in_idx)

    kernel = functools.partial(
        _focal_kernel,
        scale=float(alpha) / float(n_elem), gamma=gamma, logits=logits,
        full_rows=n_elem // LANES, rem=n_elem % LANES,
        block_rows=block_rows, steps=steps, last_block=last_block,
        needs_mask=needs_mask)

    # 2 inputs x 2 pipeline buffers per block + small headroom; keeps the
    # request well under every generation's physical VMEM (64 MiB/TC on v7x).
    block_bytes = block_rows * LANES * x2.dtype.itemsize
    vmem_limit = int(min(max(4 * block_bytes + (4 << 20), 24 << 20), 96 << 20))

    out = pl.pallas_call(
        kernel,
        out_shape=jax.ShapeDtypeStruct((num_splits, SUBLANES, LANES),
                                       jnp.float32),
        grid_spec=pltpu.PrefetchScalarGridSpec(
            num_scalar_prefetch=0,
            grid=grid,
            in_specs=[in_blk, in_blk],
            out_specs=pl.BlockSpec((1, SUBLANES, LANES), lambda p, i: (p, 0, 0)),
            scratch_shapes=[pltpu.VMEM((SUBLANES, LANES), jnp.float32)],
        ),
        compiler_params=pltpu.CompilerParams(
            dimension_semantics=("parallel", "arbitrary"),
            vmem_limit_bytes=vmem_limit),
    )(x2, t2)

    # Each split wrote its (8,128) partial already scaled by alpha/N; the final
    # tiny reduce happens in XLA.
    return jnp.sum(out)


def _focal_loss_bce_ref(inputs, targets, alpha=0.25, gamma=2):
    x = inputs.astype(jnp.float32)
    t = targets.astype(jnp.float32)
    bce = jnp.maximum(x, 0.0) - x * t + jnp.log1p(jnp.exp(-jnp.abs(x)))
    pt = jnp.exp(-bce)
    return jnp.mean(alpha * (1.0 - pt) ** gamma * bce)


if __name__ == "__main__":
    key = jax.random.PRNGKey(0)
    k1, k2 = jax.random.split(key)
    # NCHW: batch=2, channels=4, spatial=16x16
    x = jax.random.normal(k1, (2, 4, 16, 16), dtype=jnp.float32)
    targets = (jax.random.uniform(k2, (2, 4, 16, 16)) > 0.5).astype(jnp.float32)

    loss = focal_loss_bce(x, targets)
    loss = jax.block_until_ready(loss)

    ref = _focal_loss_bce_ref(x, targets)
    assert jnp.allclose(loss, ref, rtol=1e-5, atol=1e-6), (loss, ref)
    print("KERNEL_OK")
</pallas_src>

<mosaic_0001>
module attributes {stable_mosaic.version = 11 : i64} {
  func.func @_focal_kernel(%arg0: i32, %arg1: i32, %arg2: memref<16x128xf32, #tpu.memory_space<vmem>>, %arg3: memref<16x128xf32, #tpu.memory_space<vmem>>, %arg4: memref<1x8x128xf32, #tpu.memory_space<vmem>>, %arg5: memref<8x128xf32, #tpu.memory_space<vmem>>) attributes {dimension_semantics = [#tpu.dimension_semantics<parallel>, #tpu.dimension_semantics<arbitrary>], iteration_bounds = array<i64: 2, 1>, scalar_prefetch = 0 : i64, scratch_operands = 1 : i64, tpu.core_type = #tpu.core_type<tc>, window_params = [{transform_indices = @transform_0, window_bounds = array<i64: 16, 128>}, {transform_indices = @transform_1, window_bounds = array<i64: 16, 128>}, {transform_indices = @transform_2, window_bounds = array<i64: 1, 8, 128>}]} {
    %c0_i32 = arith.constant 0 : i32
    %0 = arith.cmpi eq, %arg1, %c0_i32 : i32
    %1 = arith.extui %0 : i1 to i32
    %c0_i32_0 = arith.constant 0 : i32
    %2 = arith.cmpi ne, %1, %c0_i32_0 : i32
    scf.if %2 {
      %cst_13 = arith.constant 0.000000e+00 : f32
      %33 = vector.broadcast %cst_13 : f32 to vector<8x128xf32>
      %c0_14 = arith.constant 0 : index
      %c0_15 = arith.constant 0 : index
      %34 = vector.load %arg5[%c0_14, %c0_15] : memref<8x128xf32, #tpu.memory_space<vmem>>, vector<8x128xf32>
      tpu.vector_store %arg5[%c0_14, %c0_15], %33 {strides = array<i32>} : memref<8x128xf32, #tpu.memory_space<vmem>>, vector<8x128xf32>,
    } else {
    }
    %c0 = arith.constant 0 : index
    %c0_1 = arith.constant 0 : index
    %3 = vector.load %arg2[%c0, %c0_1] : memref<16x128xf32, #tpu.memory_space<vmem>>, vector<16x128xf32>
    %c0_2 = arith.constant 0 : index
    %c0_3 = arith.constant 0 : index
    %4 = vector.load %arg3[%c0_2, %c0_3] : memref<16x128xf32, #tpu.memory_space<vmem>>, vector<16x128xf32>
    %cst = arith.constant 0.000000e+00 : f32
    %5 = vector.broadcast %cst : f32 to vector<16x128xf32>
    %6 = arith.maximumf %3, %5 : vector<16x128xf32>
    %7 = arith.mulf %3, %4 : vector<16x128xf32>
    %8 = arith.subf %6, %7 : vector<16x128xf32>
    %9 = math.absf %3 : vector<16x128xf32>
    %cst_4 = arith.constant 0.000000e+00 : f32
    %10 = vector.broadcast %cst_4 : f32 to vector<16x128xf32>
    %11 = arith.subf %10, %9 : vector<16x128xf32>
    %12 = math.exp %11 : vector<16x128xf32>
    %13 = math.log1p %12 : vector<16x128xf32>
    %14 = arith.addf %8, %13 : vector<16x128xf32>
    %cst_5 = arith.constant 0.000000e+00 : f32
    %15 = vector.broadcast %cst_5 : f32 to vector<16x128xf32>
    %16 = arith.subf %15, %14 : vector<16x128xf32>
    %17 = math.exp %16 : vector<16x128xf32>
    %cst_6 = arith.constant 1.000000e+00 : f32
    %18 = vector.broadcast %cst_6 : f32 to vector<16x128xf32>
    %19 = arith.subf %18, %17 : vector<16x128xf32>
    %20 = arith.mulf %19, %19 : vector<16x128xf32>
    %21 = arith.mulf %20, %14 : vector<16x128xf32>
    %c1_i32 = arith.constant 1 : i32
    %22 = arith.muli %arg0, %c1_i32 : i32
    %23 = arith.addi %22, %arg1 : i32
    %c0_i32_7 = arith.constant 0 : i32
    %24 = arith.cmpi slt, %23, %c0_i32_7 : i32
    %25 = arith.extui %24 : i1 to i32
    %c0_i32_8 = arith.constant 0 : i32
    %26 = arith.cmpi ne, %25, %c0_i32_8 : i32
    scf.if %26 {
      %c0_13 = arith.constant 0 : index
      %c0_14 = arith.constant 0 : index
      %33 = vector.load %arg5[%c0_13, %c0_14] : memref<8x128xf32, #tpu.memory_space<vmem>>, vector<8x128xf32>
      %34 = vector.shape_cast %21 : vector<16x128xf32> to vector<2x8x128xf32>
      %cst_15 = arith.constant dense<0.000000e+00> : vector<8x128xf32>
      %35 = vector.multi_reduction <add>, %34, %cst_15 [0] : vector<2x8x128xf32> to vector<8x128xf32>
      %36 = arith.addf %33, %35 : vector<8x128xf32>
      %c0_16 = arith.constant 0 : index
      %c0_17 = arith.constant 0 : index
      %37 = vector.load %arg5[%c0_16, %c0_17] : memref<8x128xf32, #tpu.memory_space<vmem>>, vector<8x128xf32>
      tpu.vector_store %arg5[%c0_16, %c0_17], %36 {strides = array<i32>} : memref<8x128xf32, #tpu.memory_space<vmem>>, vector<8x128xf32>,
    } else {
    }
    %c0_i32_9 = arith.constant 0 : i32
    %27 = arith.cmpi sge, %23, %c0_i32_9 : i32
    %28 = arith.extui %27 : i1 to i32
    %c0_i32_10 = arith.constant 0 : i32
    %29 = arith.cmpi ne, %28, %c0_i32_10 : i32
    scf.if %29 {
      %c16_i32 = arith.constant 16 : i32
      %33 = arith.muli %23, %c16_i32 : i32
      %34 = tpu.iota {dimensions = array<i32: 0>} : vector<16x128xi32>
      %35 = vector.broadcast %33 : i32 to vector<16x128xi32>
      %36 = arith.addi %35, %34 : vector<16x128xi32>
      %c16_i32_13 = arith.constant 16 : i32
      %37 = vector.broadcast %c16_i32_13 : i32 to vector<16x128xi32>
      %38 = arith.cmpi slt, %36, %37 : vector<16x128xi32>
      %cst_14 = arith.constant 0.000000e+00 : f32
      %39 = vector.broadcast %cst_14 : f32 to vector<16x128xf32>
      %40 = arith.select %38, %21, %39 : vector<16x128xi1>, vector<16x128xf32>
      %c0_15 = arith.constant 0 : index
      %c0_16 = arith.constant 0 : index
      %41 = vector.load %arg5[%c0_15, %c0_16] : memref<8x128xf32, #tpu.memory_space<vmem>>, vector<8x128xf32>
      %42 = vector.shape_cast %40 : vector<16x128xf32> to vector<2x8x128xf32>
      %cst_17 = arith.constant dense<0.000000e+00> : vector<8x128xf32>
      %43 = vector.multi_reduction <add>, %42, %cst_17 [0] : vector<2x8x128xf32> to vector<8x128xf32>
      %44 = arith.addf %41, %43 : vector<8x128xf32>
      %c0_18 = arith.constant 0 : index
      %c0_19 = arith.constant 0 : index
      %45 = vector.load %arg5[%c0_18, %c0_19] : memref<8x128xf32, #tpu.memory_space<vmem>>, vector<8x128xf32>
      tpu.vector_store %arg5[%c0_18, %c0_19], %44 {strides = array<i32>} : memref<8x128xf32, #tpu.memory_space<vmem>>, vector<8x128xf32>,
    } else {
    }
    %c0_i32_11 = arith.constant 0 : i32
    %30 = arith.cmpi eq, %arg1, %c0_i32_11 : i32
    %31 = arith.extui %30 : i1 to i32
    %c0_i32_12 = arith.constant 0 : i32
    %32 = arith.cmpi ne, %31, %c0_i32_12 : i32
    scf.if %32 {
      %c0_13 = arith.constant 0 : index
      %c0_14 = arith.constant 0 : index
      %33 = vector.load %arg5[%c0_13, %c0_14] : memref<8x128xf32, #tpu.memory_space<vmem>>, vector<8x128xf32>
      %cst_15 = arith.constant 1.22070313E-4 : f32
      %34 = vector.broadcast %cst_15 : f32 to vector<8x128xf32>
      %35 = arith.mulf %33, %34 : vector<8x128xf32>
      %36 = vector.shape_cast %35 : vector<8x128xf32> to vector<1x8x128xf32>
      %c0_16 = arith.constant 0 : index
      %c0_17 = arith.constant 0 : index
      %c0_18 = arith.constant 0 : index
      %37 = vector.load %arg4[%c0_16, %c0_17, %c0_18] : memref<1x8x128xf32, #tpu.memory_space<vmem>>, vector<1x8x128xf32>
      tpu.vector_store %arg4[%c0_16, %c0_17, %c0_18], %36 {strides = array<i32>} : memref<1x8x128xf32, #tpu.memory_space<vmem>>, vector<1x8x128xf32>,
    } else {
    }
    return
  }
  func.func @transform_0(%arg0: i32, %arg1: i32) -> (i32, i32) {
    %c1_i32 = arith.constant 1 : i32
    %0 = arith.muli %arg0, %c1_i32 : i32
    %1 = arith.addi %0, %arg1 : i32
    %c0_i32 = arith.constant 0 : i32
    %2 = arith.minsi %1, %c0_i32 : i32
    %c0_i32_0 = arith.constant 0 : i32
    %c0_i32_1 = arith.constant 0 : i32
    return %2, %c0_i32_0 : i32, i32
  }
  func.func @transform_1(%arg0: i32, %arg1: i32) -> (i32, i32) {
    %c1_i32 = arith.constant 1 : i32
    %0 = arith.muli %arg0, %c1_i32 : i32
    %1 = arith.addi %0, %arg1 : i32
    %c0_i32 = arith.constant 0 : i32
    %2 = arith.minsi %1, %c0_i32 : i32
    %c0_i32_0 = arith.constant 0 : i32
    %c0_i32_1 = arith.constant 0 : i32
    return %2, %c0_i32_0 : i32, i32
  }
  func.func @transform_2(%arg0: i32, %arg1: i32) -> (i32, i32, i32) {
    %c0_i32 = arith.constant 0 : i32
    %c0_i32_0 = arith.constant 0 : i32
    %c0_i32_1 = arith.constant 0 : i32
    return %arg0, %c0_i32, %c0_i32_0 : i32, i32, i32
  }
}

</mosaic_0001>

<llo_original>
// kernel: tpu_custom_call.1
$region0: #{tpu_custom_call.1}
  #allocation0 [shape = 'u32[]', space=smem, size = 0x4, offset = 0x4, fixed_abs, tag = 'smem constant byte address 0x4 - core index']
  #allocation1 [shape = 'u32[144,128]{1,0:T(1,128)}', space=vmem, size = 0x12000, scoped, tag = 'internal scratch']
  #allocation2 [shape = 'f32[8,128]{1,0:T(8,128)}', space=vmem, size = 0x1000, scoped, tag = 'scratch operand']
  %s0 = inlined_call_operand.hbm [shape: f32[16,128], index: 0, kind: input, shape index: {}]
  %s1 = inlined_call_operand.hbm [shape: f32[16,128], index: 1, kind: input, shape index: {}]
  %s2 = inlined_call_operand.hbm [shape: f32[2,8,128], index: 2, kind: output, shape index: {}]
  %s3 = sld [smem:[#allocation0]]
  $region65: #{tpu_custom_call.1} parent=0
    _
  %s5 = ssub.s32 1, %s3
  %s6 = scalar_select 0, %s5, %s3
  $region1: #{tpu_custom_call.1} parent=0
    #allocation3 [shape = 'u8[16384]{0}', space=vmem, size = 0x4000, scoped, tag = 'input window, operand 0']
    #allocation4 [shape = 's32[2]{0}', space=sflag, size = 0x8, scoped, tag = 'scoped memory for tpu_custom_call.1']
    #allocation5 [shape = 's32[2]{0}', space=sflag, size = 0x8, scoped, tag = 'scoped memory for tpu_custom_call.1']
    #allocation6 [shape = 'u8[16384]{0}', space=vmem, size = 0x4000, scoped, tag = 'input window, operand 1']
    #allocation7 [shape = 's32[2]{0}', space=sflag, size = 0x8, scoped, tag = 'scoped memory for tpu_custom_call.1']
    #allocation8 [shape = 'u8[8192]{0}', space=vmem, size = 0x2000, scoped, tag = 'output window, operand 0']
    %7 = vsyncpa [#allocation4], 0
    %s8 = scalar_lea.sflag [#allocation4], 1
    %9 = vsyncpa %s8, 0
    %10 = vsyncpa [#allocation7], 0
    %s11 = scalar_lea.sflag [#allocation7], 1
    %12 = vsyncpa %s11, 0
    %13 = vsyncpa [#allocation5], 0
    %s14 = scalar_lea.sflag [#allocation5], 1
    %15 = vsyncpa %s14, 0
    loop: start=0, step=1, limit=4
    $region2: #{tpu_custom_call.1} parent=1 // loop_pre_header
      _
    $region3: #{tpu_custom_call.1} parent=1 // loop_header
      %s17 = sphi 0, %s21
      %p18 = scmp.ge.s32.totalorder %s17, 4
      %s24 = sphi 0, %s36
      %s25 = sphi 0, %s32
      %s26 = sphi 0, %s24
      %s27 = sphi 0, %s25
      %s28 = sphi 0, %s26
      %s29 = sphi 0, %s27
      %s45 = sphi 0, %s47
      %s48 = sphi 0, %s45
      %s49 = sphi 0, %s48
      %s65 = sphi 0, %s49
      %s77 = sphi 0, %s79
      %s80 = sphi 0, %s77
      %s81 = sphi 0, %s80
      %s97 = sphi 0, %s81
      %s103 = sphi 0, %s105
      %s106 = sphi 0, %s103
      %s107 = sphi 0, %s106
      %s123 = sphi 0, %s107
    $region4: #{tpu_custom_call.1} parent=1 // loop_header_branch
      %20 = sbr.rel (%p18) target = $region8
    $region5: #{tpu_custom_call.1} parent=1 // loop_body
      %s22 = ssub.s32 %s17, 1
      %s23 = ssub.s32 %s17, 2
      %s30 = sadd.s32 1, %s25
      %p31 = scmp.ge.s32.totalorder %s30, 1
      %s32 = scalar_select %p31, 0, %s30
      %s33 = sadd.s32 1, %s24
      %s34 = scalar_select %p31, %s33, %s24
      %p35 = scmp.ge.s32.totalorder %s34, 2
      %s36 = scalar_select %p35, 0, %s34
      %s37 = sadd.s32 %s24, %s25
      %p38 = scmp.lt.s32.totalorder %s37, 0
      %s39 = scalar_select %p38, %s37, 0
      %s40 = sadd.s32 %s36, %s32
      %p41 = scmp.lt.s32.totalorder %s40, 0
      %s42 = scalar_select %p41, %s40, 0
      %s43 = ssub.s32 %s39, %s42
      %p44 = scmp.eq.s32.totalorder %s43, 0
      %s46 = sadd.s32 %s45, 1
      %s47 = scalar_select %p44, %s45, %s46
      %p50 = pneg %p44
      %p51 = scmp.eq.s32.totalorder %s17, 1
      %p52 = por %p50, %p51
      %p53 = scmp.ne.s32.totalorder %s45, %s48
      %p54 = scmp.eq.s32.totalorder %s17, 0
      %p55 = por %p53, %p54
      %p56 = scmp.ne.s32.totalorder %s45, %s48
      %p57 = scmp.eq.s32.totalorder %s22, 1
      %p58 = por %p56, %p57
      %p59 = scmp.ne.s32.totalorder %s48, %s49
      %p60 = scmp.eq.s32.totalorder %s22, 0
      %p61 = por %p59, %p60
      %p62 = scmp.ne.s32.totalorder %s48, %s49
      %p63 = scmp.eq.s32.totalorder %s23, 1
      %p64 = por %p62, %p63
      %p66 = scmp.ne.s32.totalorder %s49, %s65
      %p67 = scmp.eq.s32.totalorder %s23, 0
      %p68 = por %p66, %p67
      %s69 = sadd.s32 %s24, %s25
      %p70 = scmp.lt.s32.totalorder %s69, 0
      %s71 = scalar_select %p70, %s69, 0
      %s72 = sadd.s32 %s36, %s32
      %p73 = scmp.lt.s32.totalorder %s72, 0
      %s74 = scalar_select %p73, %s72, 0
      %s75 = ssub.s32 %s71, %s74
      %p76 = scmp.eq.s32.totalorder %s75, 0
      %s78 = sadd.s32 %s77, 1
      %s79 = scalar_select %p76, %s77, %s78
      %p82 = pneg %p76
      %p83 = scmp.eq.s32.totalorder %s17, 1
      %p84 = por %p82, %p83
      %p85 = scmp.ne.s32.totalorder %s77, %s80
      %p86 = scmp.eq.s32.totalorder %s17, 0
      %p87 = por %p85, %p86
      %p88 = scmp.ne.s32.totalorder %s77, %s80
      %p89 = scmp.eq.s32.totalorder %s22, 1
      %p90 = por %p88, %p89
      %p91 = scmp.ne.s32.totalorder %s80, %s81
      %p92 = scmp.eq.s32.totalorder %s22, 0
      %p93 = por %p91, %p92
      %p94 = scmp.ne.s32.totalorder %s80, %s81
      %p95 = scmp.eq.s32.totalorder %s23, 1
      %p96 = por %p94, %p95
      %p98 = scmp.ne.s32.totalorder %s81, %s97
      %p99 = scmp.eq.s32.totalorder %s23, 0
      %p100 = por %p98, %p99
      %s101 = ssub.s32 %s24, %s36
      %p102 = scmp.eq.s32.totalorder %s101, 0
      %s104 = sadd.s32 %s103, 1
      %s105 = scalar_select %p102, %s103, %s104
      %p108 = pneg %p102
      %p109 = scmp.eq.s32.totalorder %s17, 1
      %p110 = por %p108, %p109
      %p111 = scmp.ne.s32.totalorder %s103, %s106
      %p112 = scmp.eq.s32.totalorder %s17, 0
      %p113 = por %p111, %p112
      %p114 = scmp.ne.s32.totalorder %s103, %s106
      %p115 = scmp.eq.s32.totalorder %s22, 1
      %p116 = por %p114, %p115
      %p117 = scmp.ne.s32.totalorder %s106, %s107
      %p118 = scmp.eq.s32.totalorder %s22, 0
      %p119 = por %p117, %p118
      %p120 = scmp.ne.s32.totalorder %s106, %s107
      %p121 = scmp.eq.s32.totalorder %s23, 1
      %p122 = por %p120, %p121
      %p124 = scmp.ne.s32.totalorder %s107, %s123
      %p125 = scmp.eq.s32.totalorder %s23, 0
      %p126 = por %p124, %p125
      %p127 = scmp.le.s32.totalorder 1, %s17
      %p128 = scmp.lt.s32.totalorder %s17, 3
      %p129 = pnand %p127, %p128
      %p130 = pneg %p129
      // Predicated region
      $region9: #{tpu_custom_call.1} parent=5 // pred_check
        _
      $region10: #{tpu_custom_call.1} parent=5 // pred_check_branch
        %132 = sbr.rel (%p129) target = $region12
      $region11: #{tpu_custom_call.1} parent=5 // pred_region
        %s133 = ssub.s32 %s17, 1
      $region12: #{tpu_custom_call.1} parent=5 // pred_fallthru
        _
      %p134 = scmp.lt.s32.totalorder %s17, 2
      // Predicated region
      $region13: #{tpu_custom_call.1} parent=5 // pred_check
        %p135 = pneg %p134
      $region14: #{tpu_custom_call.1} parent=5 // pred_check_branch
        %137 = sbr.rel (%p135) target = $region16
      $region15: #{tpu_custom_call.1} parent=5 // pred_region
        // Predicated region
        $region17: #{tpu_custom_call.1} parent=15 // pred_check
          %p138 = pneg %p55
        $region18: #{tpu_custom_call.1} parent=15 // pred_check_branch
          %140 = sbr.rel (%p138) target = $region20
        $region19: #{tpu_custom_call.1} parent=15 // pred_region
          %s141 = sand.u32 %s45, 1
          %s142 = scalar_lea.sflag [#allocation4], %s141
          %s143 = sand.u32 %s45, 1
          %s144 = smul.addr %s143, 16
          %s145 = scalar_lea.vmem [#allocation3], %s144
          %s146 = sadd.s32 %s24, %s25
          %p147 = scmp.lt.s32.totalorder %s146, 0
          %s148 = scalar_select %p147, %s146, 0
          %s149 = smul.u32 2, %s148
          %s151 = ssub.s32 256, 256
          %152 = vsyncadd %s142, %s151
          %s153 = smul.addr %s149, 128
          %s154 = scalar_lea.hbm %s0, %s153
          %s155 = sshll.u32 %s145, 4
          %s156 = int_to_ptr.vmem [resolvable:$true] %s155
          %161 = dma.hbm_to_vmem [thread:$0]  %s154, 256, %s156, %s142, 128, 128, 8
        $region20: #{tpu_custom_call.1} parent=15 // pred_fallthru
          _
        // Predicated region
        $region21: #{tpu_custom_call.1} parent=15 // pred_check
          %p162 = pneg %p87
        $region22: #{tpu_custom_call.1} parent=15 // pred_check_branch
          %164 = sbr.rel (%p162) target = $region24
        $region23: #{tpu_custom_call.1} parent=15 // pred_region
          %s165 = sand.u32 %s77, 1
          %s166 = scalar_lea.sflag [#allocation7], %s165
          %s167 = sand.u32 %s77, 1
          %s168 = smul.addr %s167, 16
          %s169 = scalar_lea.vmem [#allocation6], %s168
          %s170 = sadd.s32 %s24, %s25
          %p171 = scmp.lt.s32.totalorder %s170, 0
          %s172 = scalar_select %p171, %s170, 0
          %s173 = smul.u32 2, %s172
          %s175 = ssub.s32 256, 256
          %176 = vsyncadd %s166, %s175
          %s177 = smul.addr %s173, 128
          %s178 = scalar_lea.hbm %s1, %s177
          %s179 = sshll.u32 %s169, 4
          %s180 = int_to_ptr.vmem [resolvable:$true] %s179
          %185 = dma.hbm_to_vmem [thread:$0]  %s178, 256, %s180, %s166, 128, 128, 8
        $region24: #{tpu_custom_call.1} parent=15 // pred_fallthru
          _
      $region16: #{tpu_custom_call.1} parent=5 // pred_fallthru
        _
      %p186 = scmp.le.s32.totalorder 1, %s17
      %p187 = scmp.lt.s32.totalorder %s17, 3
      %p188 = pnand %p186, %p187
      %p189 = pneg %p188
      // Predicated region
      $region25: #{tpu_custom_call.1} parent=5 // pred_check
        _
      $region26: #{tpu_custom_call.1} parent=5 // pred_check_branch
        %191 = sbr.rel (%p188) target = $region28
      $region27: #{tpu_custom_call.1} parent=5 // pred_region
        %s192 = ssub.s32 %s17, 1
        %s193 = sand.u32 %s48, 1
        %s194 = scalar_lea.sflag [#allocation4], %s193
        %s195 = sand.u32 %s48, 1
        %s196 = smul.addr %s195, 16
        %s197 = scalar_lea.vmem [#allocation3], %s196
        // Predicated region
        $region29: #{tpu_custom_call.1} parent=27 // pred_check
          %p198 = pneg %p61
        $region30: #{tpu_custom_call.1} parent=27 // pred_check_branch
          %200 = sbr.rel (%p198) target = $region32
        $region31: #{tpu_custom_call.1} parent=27 // pred_region
          %201 = dma.done %s194, 256
        $region32: #{tpu_custom_call.1} parent=27 // pred_fallthru
          _
        %s202 = sand.u32 %s80, 1
        %s203 = scalar_lea.sflag [#allocation7], %s202
        %s204 = sand.u32 %s80, 1
        %s205 = smul.addr %s204, 16
        %s206 = scalar_lea.vmem [#allocation6], %s205
        // Predicated region
        $region33: #{tpu_custom_call.1} parent=27 // pred_check
          %p207 = pneg %p93
        $region34: #{tpu_custom_call.1} parent=27 // pred_check_branch
          %209 = sbr.rel (%p207) target = $region36
        $region35: #{tpu_custom_call.1} parent=27 // pred_region
          %210 = dma.done %s203, 256
        $region36: #{tpu_custom_call.1} parent=27 // pred_fallthru
          _
        %s211 = sand.u32 %s48, 1
        %s212 = scalar_lea.sflag [#allocation4], %s211
        %s213 = sand.u32 %s48, 1
        %s214 = smul.addr %s213, 16
        %s215 = scalar_lea.vmem [#allocation3], %s214
        %p216 = pneg %p61
        %p217 = pneg %p58
        %s218 = sand.u32 %s80, 1
        %s219 = scalar_lea.sflag [#allocation7], %s218
        %s220 = sand.u32 %s80, 1
        %s221 = smul.addr %s220, 16
        %s222 = scalar_lea.vmem [#allocation6], %s221
        %p223 = pneg %p93
        %p224 = pneg %p90
        %p225 = pneg %p119
        %p226 = pneg %p116
        %s227 = sand.u32 %s106, 1
        %s228 = scalar_lea.sflag [#allocation5], %s227
        %s229 = sand.u32 %s106, 1
        %s230 = smul.addr %s229, 8
        %s231 = scalar_lea.vmem [#allocation8], %s230
        %s232 = sadd.s32 %s26, %s27
        %p233 = scmp.lt.s32.totalorder %s232, 0
        %s234 = scalar_select %p233, %s232, 0
        %s235 = smul.u32 2, %s234
        %s236 = sadd.s32 %s26, %s27
        %p237 = scmp.lt.s32.totalorder %s236, 0
        %s238 = scalar_select %p237, %s236, 0
        %s239 = smul.u32 2, %s238
        %p240 = scmp.eq.s32.totalorder %s27, 0
        // Predicated region
        $region37: #{tpu_custom_call.1} parent=27 // pred_check
          %p241 = pneg %p240
        $region38: #{tpu_custom_call.1} parent=27 // pred_check_branch
          %243 = sbr.rel (%p241) target = $region40
        $region39: #{tpu_custom_call.1} parent=27 // pred_region
          %244 = vst [vmem:[#allocation2] sm:$0xff] 0.0
        $region40: #{tpu_custom_call.1} parent=27 // pred_fallthru
          _
        %v245 = vld [vmem:[%s197] sm:$0xff]
        %v246 = vld [vmem:[%s197 + $0x8] sm:$0xff]
        %v247 = vld [vmem:[%s206] sm:$0xff]
        %v248 = vld [vmem:[%s206 + $0x8] sm:$0xff]
        %v249 = vmax.f32 %v245, 0.0
        %v250 = vmax.f32 %v246, 0.0
        %v251 = vmul.f32 %v245, %v247
        %v252 = vmul.f32 %v246, %v248
        %v253 = vsub.f32 %v249, %v251
        %v254 = vsub.f32 %v250, %v252
        %v255 = vand.u32 2147483647, %v245
        %v256 = vand.u32 2147483647, %v246
        %v257 = vsub.f32 0.0, %v255
        %v258 = vsub.f32 0.0, %v256
        %v259 = vmul.f32 %v257, 1.442695
        %v260 = vpow.pop %v259
        %v261 = vmul.f32 %v258, 1.442695
        %v262 = vpow.pop %v261
        %v263 = vadd.f32 %v260, 1.0
        %v264 = vlog2.pop %v263
        %v265 = vmul.f32 %v264, 0.6931472
        %v266 = vmul.f32 -0.5, %v260
        %v267 = vadd.f32 %v266, 1.0
        %v268 = vmul.f32 %v267, %v260
        %v269 = vand.u32 2147483647, %v260
        %vm270 = vcmp.lt.f32.partialorder %v269, 0.0004427343
        %v271 = vsel %vm270, %v268, %v265
        %v272 = vadd.f32 %v262, 1.0
        %v273 = vlog2.pop %v272
        %v274 = vmul.f32 %v273, 0.6931472
        %v275 = vmul.f32 -0.5, %v262
        %v276 = vadd.f32 %v275, 1.0
        %v277 = vmul.f32 %v276, %v262
        %v278 = vand.u32 2147483647, %v262
        %vm279 = vcmp.lt.f32.partialorder %v278, 0.0004427343
        %v280 = vsel %vm279, %v277, %v274
        %v281 = vadd.f32 %v253, %v271
        %v282 = vadd.f32 %v254, %v280
        %v283 = vsub.f32 0.0, %v281
        %v284 = vsub.f32 0.0, %v282
        %v285 = vmul.f32 %v283, 1.442695
        %v286 = vpow.pop %v285
        %v287 = vmul.f32 %v284, 1.442695
        %v288 = vpow.pop %v287
        %v289 = vsub.f32 1.0, %v286
        %v290 = vsub.f32 1.0, %v288
        %v291 = vmul.f32 %v289, %v289
        %v292 = vmul.f32 %v290, %v290
        %v293 = vmul.f32 %v291, %v281
        %v294 = vmul.f32 %v292, %v282
        %s295 = sadd.s32 %s26, %s27
        %p296 = scmp.lt.s32.totalorder %s295, 0
        // Predicated region
        $region41: #{tpu_custom_call.1} parent=27 // pred_check
          %p297 = pneg %p296
        $region42: #{tpu_custom_call.1} parent=27 // pred_check_branch
          %299 = sbr.rel (%p297) target = $region44
        $region43: #{tpu_custom_call.1} parent=27 // pred_region
          %v300 = vld [vmem:[#allocation2] sm:$0xff]
          %v301 = vadd.f32 %v293, %v294
          %v302 = vadd.f32 %v300, %v301
          %303 = vst [vmem:[#allocation2] sm:$0xff] %v302
        $region44: #{tpu_custom_call.1} parent=27 // pred_fallthru
          _
        %p304 = scmp.ge.s32.totalorder %s295, 0
        // Predicated region
        $region45: #{tpu_custom_call.1} parent=27 // pred_check
          %p305 = pneg %p304
        $region46: #{tpu_custom_call.1} parent=27 // pred_check_branch
          %307 = sbr.rel (%p305) target = $region48
        $region47: #{tpu_custom_call.1} parent=27 // pred_region
          %s308 = smul.u32 %s295, 16
          %v309 = vlaneseq
          %v310 = vshrl.u32 %v309, 7
          %v311 = vadd.s32 %v310, 8
          %v312 = vstv %s308
          %v313 = vadd.s32 %v312, %v310
          %v314 = vadd.s32 %v312, %v311
          %vm315 = vcmp.lt.s32.totalorder %v313, 16
          %vm316 = vcmp.lt.s32.totalorder %v314, 16
          %v317 = vsel %vm315, %v293, 0.0
          %v318 = vsel %vm316, %v294, 0.0
          %v319 = vld [vmem:[#allocation2] sm:$0xff]
          %v320 = vadd.f32 %v317, %v318
          %v321 = vadd.f32 %v319, %v320
          %322 = vst [vmem:[#allocation2] sm:$0xff] %v321
        $region48: #{tpu_custom_call.1} parent=27 // pred_fallthru
          _
        // Predicated region
        $region49: #{tpu_custom_call.1} parent=27 // pred_check
          %p323 = pneg %p240
        $region50: #{tpu_custom_call.1} parent=27 // pred_check_branch
          %325 = sbr.rel (%p323) target = $region52
        $region51: #{tpu_custom_call.1} parent=27 // pred_region
          %v326 = vld [vmem:[#allocation2] sm:$0xff]
          %v327 = vmul.f32 %v326, 0.00012207031
          %328 = vst [vmem:[%s231] sm:$0xff] %v327
        $region52: #{tpu_custom_call.1} parent=27 // pred_fallthru
          _
        %s329 = sand.u32 %s106, 1
        %s330 = scalar_lea.sflag [#allocation5], %s329
        %s331 = sand.u32 %s106, 1
        %s332 = smul.addr %s331, 8
        %s333 = scalar_lea.vmem [#allocation8], %s332
        // Predicated region
        $region53: #{tpu_custom_call.1} parent=27 // pred_check
          %p334 = pneg %p116
        $region54: #{tpu_custom_call.1} parent=27 // pred_check_branch
          %336 = sbr.rel (%p334) target = $region56
        $region55: #{tpu_custom_call.1} parent=27 // pred_region
          %s338 = ssub.s32 128, 128
          %339 = vsyncadd %s330, %s338
          %s340 = smul.addr %s26, 128
          %s341 = scalar_lea.hbm %s2, %s340
          %s343 = sshll.u32 %s333, 4
          %s344 = int_to_ptr.vmem [resolvable:$true] %s343
          %346 = dma.vmem_to_hbm [thread:$0]  %s344, 128, %s341, %s330
        $region56: #{tpu_custom_call.1} parent=27 // pred_fallthru
          _
      $region28: #{tpu_custom_call.1} parent=5 // pred_fallthru
        _
      %p347 = scmp.le.s32.totalorder 2, %s17
      // Predicated region
      $region57: #{tpu_custom_call.1} parent=5 // pred_check
        %p348 = pneg %p347
      $region58: #{tpu_custom_call.1} parent=5 // pred_check_branch
        %350 = sbr.rel (%p348) target = $region60
      $region59: #{tpu_custom_call.1} parent=5 // pred_region
        %s351 = ssub.s32 %s17, 2
        // Predicated region
        $region61: #{tpu_custom_call.1} parent=59 // pred_check
          %p352 = pneg %p122
        $region62: #{tpu_custom_call.1} parent=59 // pred_check_branch
          %354 = sbr.rel (%p352) target = $region64
        $region63: #{tpu_custom_call.1} parent=59 // pred_region
          %s355 = sand.u32 %s107, 1
          %s356 = scalar_lea.sflag [#allocation5], %s355
          %s357 = sand.u32 %s107, 1
          %s358 = smul.addr %s357, 8
          %s359 = scalar_lea.vmem [#allocation8], %s358
          %360 = dma.done %s356, 128
        $region64: #{tpu_custom_call.1} parent=59 // pred_fallthru
          _
      $region60: #{tpu_custom_call.1} parent=5 // pred_fallthru
        _
    $region6: #{tpu_custom_call.1} parent=1 // loop_footer
      %s21 = sadd.s32 1, %s17
    $region7: #{tpu_custom_call.1} parent=1 // loop_footer_branch
      %16 = sbr.rel target = $region3
    $region8: #{tpu_custom_call.1} parent=1 // loop_exit
      _
    %361 = vsyncpa [#allocation4], 1
    %s362 = scalar_lea.sflag [#allocation4], 1
    %363 = vsyncpa %s362, 1
    %364 = vsyncpa [#allocation7], 1
    %s365 = scalar_lea.sflag [#allocation7], 1
    %366 = vsyncpa %s365, 1
    %367 = vsyncpa [#allocation5], 1
    %s368 = scalar_lea.sflag [#allocation5], 1
    %369 = vsyncpa %s368, 1

</llo_original>
